<compile_context>
chip_gen: v6e
topology: v6e:2x2x1
jax: 0.10.0
libtpu: 0.0.40
codegen_flags: <defaults>
</compile_context>

<pallas_src>
import functools

import jax
import jax.numpy as jnp
from jax.experimental import pallas as pl
from jax.experimental.pallas import tpu as pltpu

# ---------------- configuration (mirrors HetControlMlpEmpirical.__init__) ----
INPUT_DIM = 32
N_AGENTS = 4
OUTPUT_DIM = 16                 # per-agent action logits
HIDDEN = 32                     # num_cells -> two hidden layers of HIDDEN
BATCH = 8
DESIRED_SND = 1.0
PROBABILISTIC = False
TAU = 0.1
BOOTSTRAP_FROM_DESIRED_SND = False
AGENT_OUT_DIM = OUTPUT_DIM // 2 if PROBABILISTIC else OUTPUT_DIM

# packed-parameter slab layout (agents 0..A-1 blocks, then shared block)
WIDTH_H = (N_AGENTS + 1) * HIDDEN                      # 160 lanes (hidden)
WIDTH_O = N_AGENTS * AGENT_OUT_DIM + OUTPUT_DIM        # 80 lanes (outputs)
ROW_W1 = 0
ROW_W2 = ROW_W1 + INPUT_DIM                            # 32
ROW_W3 = ROW_W2 + WIDTH_H                              # 192
ROW_B1 = ROW_W3 + WIDTH_H                              # 352 (8-aligned)
ROW_B2 = ROW_B1 + 8                                    # 360
ROW_B3 = ROW_B2 + 8                                    # 368
PARAM_ROWS = ROW_B3 + 8                                # 376

# output slab columns
COL_NORM = OUTPUT_DIM                                  # 16
COL_DIST = OUTPUT_DIM + 1                              # 17
OUT_COLS = OUTPUT_DIM + 2                              # 18


# ---------------------------- fused kernel ------------------------------------
def fused_kernel(x_ref, p_ref, est_ref, out_ref, *, compute_estimate):
    x = x_ref[...]                                     # (N, INPUT_DIM) f32
    n = x.shape[0]
    A, D, H = N_AGENTS, AGENT_OUT_DIM, HIDDEN

    # ---- packed parameters (single VMEM slab, static 8-aligned slices) ------
    w1 = p_ref[ROW_W1:ROW_W1 + INPUT_DIM, :]          # (32, 160)
    w2 = p_ref[ROW_W2:ROW_W2 + WIDTH_H, :]            # (160, 160) block-diag
    w3 = p_ref[ROW_W3:ROW_W3 + WIDTH_H, 0:WIDTH_O]    # (160, 80)  block-diag
    b1 = p_ref[ROW_B1:ROW_B1 + 1, :]                  # (1, 160)
    b2 = p_ref[ROW_B2:ROW_B2 + 1, :]                  # (1, 160)
    b3 = p_ref[ROW_B3:ROW_B3 + 1, 0:WIDTH_O]          # (1, 80)

    # ---- shared + all per-agent MLPs in one lane-dense chain ----------------
    h = jnp.tanh(jnp.dot(x, w1, preferred_element_type=jnp.float32) + b1)
    h = jnp.tanh(jnp.dot(h, w2, preferred_element_type=jnp.float32) + b2)
    full = jnp.dot(h, w3, preferred_element_type=jnp.float32) + b3   # (N, 80)

    cross = full[:, :A * D]                            # every agent net on every row
    shared_out = full[:, A * D:]                       # shared MLP output (N, OUTPUT_DIM)

    # ---- agent id per row, generated in-kernel (rows ordered (batch, agent)) -
    row = jax.lax.broadcasted_iota(jnp.int32, (n, 1), 0)
    if N_AGENTS & (N_AGENTS - 1) == 0:
        aid = jnp.bitwise_and(row, N_AGENTS - 1)       # power-of-two fast path
    else:
        aid = row % N_AGENTS

    # ---- diagonal: agent k's network on rows whose agent index is k ---------
    # one lane-block mask + select, then (A-1) narrow adds (no per-agent
    # broadcast/select loop, no integer division on the VPU).
    lane = jax.lax.broadcasted_iota(jnp.int32, (n, A * D), 1)
    lo = aid * D
    mask = (lane >= lo) & (lane < lo + D)
    masked = jnp.where(mask, cross, 0.0)
    agent_out = masked[:, 0:D]
    for k in range(1, A):
        agent_out = agent_out + masked[:, k * D:(k + 1) * D]

    # ---- SND estimate (mean pairwise L2 distance over all rows) -------------
    est_v = jnp.full((1, 1), est_ref[0], jnp.float32)  # SMEM scalar -> (1,1) splat
    if compute_estimate:
        dn_total = jnp.zeros((n, 1), jnp.float32)
        for i in range(A):
            for j in range(i + 1, A):
                dij = cross[:, i * D:(i + 1) * D] - cross[:, j * D:(j + 1) * D]
                dn_total = dn_total + jnp.sqrt(
                    jnp.sum(dij * dij, axis=1, keepdims=True))       # (N,1)
        n_pairs = A * (A - 1) // 2
        distance = (jnp.sum(dn_total, axis=0, keepdims=True)
                    * jnp.float32(1.0 / (n_pairs * n)))              # (1,1)
        boot = (jnp.full_like(distance, DESIRED_SND)
                if BOOTSTRAP_FROM_DESIRED_SND else distance)
        dist_v = jnp.where(jnp.isnan(est_v), boot,
                           jnp.float32(1.0 - TAU) * est_v
                           + jnp.float32(TAU) * distance)
    else:
        dist_v = est_v

    # ---- scaling = desired_snd / dist (with special cases) ------------------
    # TODO(synk): torch divides with no epsilon; dist -> 0 yields inf, matching
    # the reference behavior.
    if DESIRED_SND == 0:
        scaling = jnp.zeros_like(dist_v)
    elif DESIRED_SND < 0:
        scaling = jnp.ones_like(dist_v)
    else:
        scaling = jnp.where(jnp.isnan(dist_v), jnp.ones_like(dist_v),
                            jnp.float32(DESIRED_SND) / dist_v)

    # ---- combine + per-row logits norm, all packed into one output slab -----
    if PROBABILISTIC:
        half = OUTPUT_DIM // 2
        loc = shared_out[:, :half] + agent_out * scaling
        out = jnp.concatenate([loc, shared_out[:, half:]], axis=-1)
        # TODO(synk): overflowing_logits_norm assumed to measure only the loc
        # half in probabilistic mode.
        norm_src = loc
    else:
        out = shared_out + agent_out * scaling
        norm_src = out

    out_ref[:, 0:OUTPUT_DIM] = out
    out_ref[:, COL_NORM:COL_NORM + 1] = jnp.sqrt(
        jnp.sum(norm_src * norm_src, axis=-1, keepdims=True))
    out_ref[:, COL_DIST:COL_DIST + 1] = jnp.broadcast_to(dist_v, (n, 1))


# ---------------------------- forward wrapper ----------------------------------
def het_control_forward(x, params_slab, estimated_snd,
                        compute_estimate=True, update_estimate=True):
    """Returns (logits, out_loc_norm, estimated_snd_out, new_estimated_snd_state)."""
    b, a, f = x.shape
    n = b * a
    x2d = x.reshape(n, f).astype(jnp.float32)
    est = estimated_snd.reshape(1).astype(jnp.float32)

    do_est = bool(compute_estimate) and (DESIRED_SND > 0) and (N_AGENTS > 1)
    kern = functools.partial(fused_kernel, compute_estimate=do_est)

    vmem = pl.BlockSpec(memory_space=pltpu.MemorySpace.VMEM)
    smem = pl.BlockSpec(memory_space=pltpu.MemorySpace.SMEM)
    slab = pl.pallas_call(
        kern,
        out_shape=jax.ShapeDtypeStruct((n, OUT_COLS), jnp.float32),
        in_specs=[vmem, vmem, smem],
        out_specs=vmem,
    )(x2d, params_slab, est)

    logits = slab[:, :OUTPUT_DIM].reshape(b, a, OUTPUT_DIM)
    out_loc_norm = slab[:, COL_NORM].reshape(b, a)
    dist_out = slab[0, COL_DIST].reshape(1)
    new_estimated_snd = dist_out if update_estimate else estimated_snd
    return logits, out_loc_norm, dist_out, new_estimated_snd


# ------------------- parameter packing (done once, outside the hot path) -------
def pack_params(shared_params, agent_params):
    """Pack shared + per-agent MLPs into a single (PARAM_ROWS, WIDTH_H) slab."""
    sw1, sb1, sw2, sb2, sw3, sb3 = shared_params
    aw1, ab1, aw2, ab2, aw3, ab3 = agent_params
    A, H, F = N_AGENTS, HIDDEN, INPUT_DIM
    D, O = AGENT_OUT_DIM, OUTPUT_DIM

    # layer 1: agents packed on lanes, shared MLP appended as block A
    w1 = jnp.concatenate(
        [jnp.transpose(aw1, (1, 0, 2)).reshape(F, A * H), sw1], axis=1)
    b1 = jnp.concatenate(
        [jnp.transpose(ab1, (1, 0, 2)).reshape(1, A * H), sb1], axis=1)

    # layer 2: block-diagonal (per-agent blocks + shared block)
    w2 = jnp.zeros((WIDTH_H, WIDTH_H), jnp.float32)
    for k in range(A):
        w2 = w2.at[k * H:(k + 1) * H, k * H:(k + 1) * H].set(aw2[k])
    w2 = w2.at[A * H:, A * H:].set(sw2)
    b2 = jnp.concatenate(
        [jnp.transpose(ab2, (1, 0, 2)).reshape(1, A * H), sb2], axis=1)

    # layer 3: block-diagonal, lane-padded to WIDTH_H (kernel reads [:, :WIDTH_O])
    w3 = jnp.zeros((WIDTH_H, WIDTH_H), jnp.float32)
    for k in range(A):
        w3 = w3.at[k * H:(k + 1) * H, k * D:(k + 1) * D].set(aw3[k])
    w3 = w3.at[A * H:, A * D:A * D + O].set(sw3)
    b3 = jnp.zeros((1, WIDTH_H), jnp.float32)
    b3 = b3.at[:, :A * D].set(jnp.transpose(ab3, (1, 0, 2)).reshape(1, A * D))
    b3 = b3.at[:, A * D:A * D + O].set(sb3)

    def pad8(row):  # each bias row gets its own 8-aligned region
        return jnp.concatenate([row, jnp.zeros((7, WIDTH_H), jnp.float32)], axis=0)

    slab = jnp.concatenate([w1, w2, w3, pad8(b1), pad8(b2), pad8(b3)], axis=0)
    assert slab.shape == (PARAM_ROWS, WIDTH_H)
    return slab.astype(jnp.float32)


# ---------------------------- pure-JAX reference -------------------------------
def _mlp_body(x, w1, b1, w2, b2, w3, b3):
    h = jnp.tanh(jnp.dot(x, w1) + b1)
    h = jnp.tanh(jnp.dot(h, w2) + b2)
    return jnp.dot(h, w3) + b3


def ref_forward(x, shared_params, agent_params, estimated_snd):
    b, a, f = x.shape
    n = b * a
    x2d = x.reshape(n, f).astype(jnp.float32)
    shared_out = _mlp_body(x2d, *shared_params)
    aw1, ab1, aw2, ab2, aw3, ab3 = agent_params
    cross = jnp.stack([_mlp_body(x2d, aw1[k], ab1[k], aw2[k], ab2[k], aw3[k], ab3[k])
                       for k in range(a)], axis=0)                    # [A, N, D]
    oc = cross.reshape(a, b, a, AGENT_OUT_DIM)
    idx = jnp.arange(a)
    agent_out = jnp.transpose(oc[idx, :, idx, :], (1, 0, 2)).reshape(n, AGENT_OUT_DIM)
    diff = cross[:, None] - cross[None, :]
    pd = jnp.sqrt(jnp.sum(diff * diff, axis=-1)).mean(-1)
    mask = jnp.triu(jnp.ones((a, a), dtype=bool), k=1)
    distance = jnp.sum(jnp.where(mask, pd, 0.0)) / (a * (a - 1) // 2)
    boot = jnp.float32(DESIRED_SND) if BOOTSTRAP_FROM_DESIRED_SND else distance
    dist = jnp.where(jnp.isnan(estimated_snd), boot,
                     (1.0 - TAU) * estimated_snd + TAU * distance)
    scaling = jnp.where(jnp.isnan(dist), 1.0, DESIRED_SND / dist)
    if PROBABILISTIC:
        half = OUTPUT_DIM // 2
        loc = shared_out[:, :half] + agent_out * scaling
        out = jnp.concatenate([loc, shared_out[:, half:]], axis=-1)
        norm = jnp.sqrt(jnp.sum(loc * loc, axis=-1))
    else:
        out = shared_out + agent_out * scaling
        norm = jnp.sqrt(jnp.sum(out * out, axis=-1))
    return out.reshape(b, a, OUTPUT_DIM), norm.reshape(b, a), dist


# ---------------------------- parameter init -----------------------------------
def init_params(key):
    def lin(key, fan_in, shape):
        return jax.random.normal(key, shape, jnp.float32) / jnp.sqrt(fan_in)

    ks = jax.random.split(key, 12)
    shared = (
        lin(ks[0], INPUT_DIM, (INPUT_DIM, HIDDEN)),
        lin(ks[1], INPUT_DIM, (1, HIDDEN)),
        lin(ks[2], HIDDEN, (HIDDEN, HIDDEN)),
        lin(ks[3], HIDDEN, (1, HIDDEN)),
        lin(ks[4], HIDDEN, (HIDDEN, OUTPUT_DIM)),
        lin(ks[5], HIDDEN, (1, OUTPUT_DIM)),
    )
    agent = (
        lin(ks[6], INPUT_DIM, (N_AGENTS, INPUT_DIM, HIDDEN)),
        lin(ks[7], INPUT_DIM, (N_AGENTS, 1, HIDDEN)),
        lin(ks[8], HIDDEN, (N_AGENTS, HIDDEN, HIDDEN)),
        lin(ks[9], HIDDEN, (N_AGENTS, 1, HIDDEN)),
        lin(ks[10], HIDDEN, (N_AGENTS, HIDDEN, AGENT_OUT_DIM)),
        lin(ks[11], HIDDEN, (N_AGENTS, 1, AGENT_OUT_DIM)),
    )
    return shared, agent


if __name__ == "__main__":
    key = jax.random.PRNGKey(0)
    k_params, k_obs = jax.random.split(key)
    shared_params, agent_params = init_params(k_params)
    params_slab = pack_params(shared_params, agent_params)   # one-time packing

    # observation: [batch, n_agents, input_dim]
    x = jax.random.normal(k_obs, (BATCH, N_AGENTS, INPUT_DIM), jnp.float32)
    # registered buffer 'estimated_snd' starts as NaN
    estimated_snd = jnp.array([float("nan")], jnp.float32)

    fwd = jax.jit(het_control_forward,
                  static_argnames=("compute_estimate", "update_estimate"))
    logits, out_loc_norm, est_snd_out, new_est = fwd(
        x, params_slab, estimated_snd)
    jax.block_until_ready((logits, out_loc_norm, est_snd_out, new_est))

    # sanity check against a pure-JAX reference (unpacked per-agent params)
    ref_logits, ref_norm, ref_dist = ref_forward(x, shared_params, agent_params,
                                                 estimated_snd)
    assert logits.shape == (BATCH, N_AGENTS, OUTPUT_DIM)
    assert out_loc_norm.shape == (BATCH, N_AGENTS)
    assert jnp.allclose(logits, ref_logits, rtol=1e-2, atol=1e-2)
    assert jnp.allclose(out_loc_norm, ref_norm, rtol=1e-2, atol=1e-2)
    assert jnp.allclose(est_snd_out, ref_dist, rtol=1e-2, atol=1e-2)

    print("KERNEL_OK")
</pallas_src>

<mosaic_0001>
module attributes {stable_mosaic.version = 11 : i64} {
  func.func @fused_kernel(%arg0: memref<32x32xf32, #tpu.memory_space<vmem>>, %arg1: memref<376x160xf32, #tpu.memory_space<vmem>>, %arg2: memref<1xf32, #tpu.memory_space<smem>>, %arg3: memref<32x18xf32, #tpu.memory_space<vmem>>) attributes {dimension_semantics = [], scalar_prefetch = 0 : i64, scratch_operands = 0 : i64, tpu.core_type = #tpu.core_type<tc>} {
    %c0 = arith.constant 0 : index
    %c0_0 = arith.constant 0 : index
    %0 = vector.load %arg0[%c0, %c0_0] : memref<32x32xf32, #tpu.memory_space<vmem>>, vector<32x32xf32>
    %c0_1 = arith.constant 0 : index
    %c0_2 = arith.constant 0 : index
    %1 = vector.load %arg1[%c0_1, %c0_2] : memref<376x160xf32, #tpu.memory_space<vmem>>, vector<32x160xf32>
    %c32 = arith.constant 32 : index
    %c0_3 = arith.constant 0 : index
    %2 = vector.load %arg1[%c32, %c0_3] : memref<376x160xf32, #tpu.memory_space<vmem>>, vector<160x160xf32>
    %c192 = arith.constant 192 : index
    %c0_4 = arith.constant 0 : index
    %3 = vector.load %arg1[%c192, %c0_4] : memref<376x160xf32, #tpu.memory_space<vmem>>, vector<160x80xf32>
    %c352 = arith.constant 352 : index
    %c0_5 = arith.constant 0 : index
    %4 = vector.load %arg1[%c352, %c0_5] : memref<376x160xf32, #tpu.memory_space<vmem>>, vector<1x160xf32>
    %c360 = arith.constant 360 : index
    %c0_6 = arith.constant 0 : index
    %5 = vector.load %arg1[%c360, %c0_6] : memref<376x160xf32, #tpu.memory_space<vmem>>, vector<1x160xf32>
    %c368 = arith.constant 368 : index
    %c0_7 = arith.constant 0 : index
    %6 = vector.load %arg1[%c368, %c0_7] : memref<376x160xf32, #tpu.memory_space<vmem>>, vector<1x80xf32>
    %cst = arith.constant dense<0.000000e+00> : vector<32x160xf32>
    %7 = tpu.matmul %0, %1, %cst {dimension_numbers = #tpu.dot_dimension_numbers<[1], [0], [0], [1], [0, 0, 1, 1], [], []>} : vector<32x32xf32>, vector<32x160xf32>, vector<32x160xf32> -> vector<32x160xf32>
    %8 = vector.broadcast %4 : vector<1x160xf32> to vector<32x160xf32>
    %9 = arith.addf %7, %8 : vector<32x160xf32>
    %10 = math.tanh %9 : vector<32x160xf32>
    %cst_8 = arith.constant dense<0.000000e+00> : vector<32x160xf32>
    %11 = tpu.matmul %10, %2, %cst_8 {dimension_numbers = #tpu.dot_dimension_numbers<[1], [0], [0], [1], [0, 0, 1, 1], [], []>} : vector<32x160xf32>, vector<160x160xf32>, vector<32x160xf32> -> vector<32x160xf32>
    %12 = vector.broadcast %5 : vector<1x160xf32> to vector<32x160xf32>
    %13 = arith.addf %11, %12 : vector<32x160xf32>
    %14 = math.tanh %13 : vector<32x160xf32>
    %cst_9 = arith.constant dense<0.000000e+00> : vector<32x80xf32>
    %15 = tpu.matmul %14, %3, %cst_9 {dimension_numbers = #tpu.dot_dimension_numbers<[1], [0], [0], [1], [0, 0, 1, 1], [], []>} : vector<32x160xf32>, vector<160x80xf32>, vector<32x80xf32> -> vector<32x80xf32>
    %16 = vector.broadcast %6 : vector<1x80xf32> to vector<32x80xf32>
    %17 = arith.addf %15, %16 : vector<32x80xf32>
    %18 = vector.extract_strided_slice %17 {offsets = [0, 0], sizes = [32, 64], strides = [1, 1]} : vector<32x80xf32> to vector<32x64xf32>
    %19 = vector.extract_strided_slice %17 {offsets = [0, 64], sizes = [32, 16], strides = [1, 1]} : vector<32x80xf32> to vector<32x16xf32>
    %20 = tpu.iota {dimensions = array<i32: 0>} : vector<32x1xi32>
    %c3_i32 = arith.constant 3 : i32
    %21 = vector.broadcast %c3_i32 : i32 to vector<32x1xi32>
    %22 = arith.andi %20, %21 : vector<32x1xi32>
    %23 = tpu.iota {dimensions = array<i32: 1>} : vector<32x64xi32>
    %c16_i32 = arith.constant 16 : i32
    %24 = vector.broadcast %c16_i32 : i32 to vector<32x1xi32>
    %25 = arith.muli %22, %24 : vector<32x1xi32>
    %26 = vector.broadcast %25 : vector<32x1xi32> to vector<32x64xi32>
    %27 = arith.cmpi sge, %23, %26 : vector<32x64xi32>
    %c16_i32_10 = arith.constant 16 : i32
    %28 = vector.broadcast %c16_i32_10 : i32 to vector<32x1xi32>
    %29 = arith.addi %25, %28 : vector<32x1xi32>
    %30 = vector.broadcast %29 : vector<32x1xi32> to vector<32x64xi32>
    %31 = arith.cmpi slt, %23, %30 : vector<32x64xi32>
    %32 = arith.andi %27, %31 : vector<32x64xi1>
    %cst_11 = arith.constant 0.000000e+00 : f32
    %33 = vector.broadcast %cst_11 : f32 to vector<32x64xf32>
    %34 = arith.select %32, %18, %33 : vector<32x64xi1>, vector<32x64xf32>
    %35 = vector.extract_strided_slice %34 {offsets = [0, 0], sizes = [32, 16], strides = [1, 1]} : vector<32x64xf32> to vector<32x16xf32>
    %36 = vector.extract_strided_slice %34 {offsets = [0, 16], sizes = [32, 16], strides = [1, 1]} : vector<32x64xf32> to vector<32x16xf32>
    %37 = arith.addf %35, %36 : vector<32x16xf32>
    %38 = vector.extract_strided_slice %34 {offsets = [0, 32], sizes = [32, 16], strides = [1, 1]} : vector<32x64xf32> to vector<32x16xf32>
    %39 = arith.addf %37, %38 : vector<32x16xf32>
    %40 = vector.extract_strided_slice %34 {offsets = [0, 48], sizes = [32, 16], strides = [1, 1]} : vector<32x64xf32> to vector<32x16xf32>
    %41 = arith.addf %39, %40 : vector<32x16xf32>
    %c0_12 = arith.constant 0 : index
    %42 = memref.load %arg2[%c0_12] : memref<1xf32, #tpu.memory_space<smem>>
    %43 = vector.broadcast %42 : f32 to vector<1x1xf32>
    %cst_13 = arith.constant 0.000000e+00 : f32
    %44 = vector.broadcast %cst_13 : f32 to vector<32x1xf32>
    %45 = vector.extract_strided_slice %18 {offsets = [0, 0], sizes = [32, 16], strides = [1, 1]} : vector<32x64xf32> to vector<32x16xf32>
    %46 = vector.extract_strided_slice %18 {offsets = [0, 16], sizes = [32, 16], strides = [1, 1]} : vector<32x64xf32> to vector<32x16xf32>
    %47 = arith.subf %45, %46 : vector<32x16xf32>
    %48 = arith.mulf %47, %47 : vector<32x16xf32>
    %cst_14 = arith.constant dense<0.000000e+00> : vector<32xf32>
    %49 = vector.multi_reduction <add>, %48, %cst_14 [1] : vector<32x16xf32> to vector<32xf32>
    %50 = vector.shape_cast %49 : vector<32xf32> to vector<32x1xf32>
    %51 = math.sqrt %50 : vector<32x1xf32>
    %52 = arith.addf %44, %51 : vector<32x1xf32>
    %53 = vector.extract_strided_slice %18 {offsets = [0, 0], sizes = [32, 16], strides = [1, 1]} : vector<32x64xf32> to vector<32x16xf32>
    %54 = vector.extract_strided_slice %18 {offsets = [0, 32], sizes = [32, 16], strides = [1, 1]} : vector<32x64xf32> to vector<32x16xf32>
    %55 = arith.subf %53, %54 : vector<32x16xf32>
    %56 = arith.mulf %55, %55 : vector<32x16xf32>
    %cst_15 = arith.constant dense<0.000000e+00> : vector<32xf32>
    %57 = vector.multi_reduction <add>, %56, %cst_15 [1] : vector<32x16xf32> to vector<32xf32>
    %58 = vector.shape_cast %57 : vector<32xf32> to vector<32x1xf32>
    %59 = math.sqrt %58 : vector<32x1xf32>
    %60 = arith.addf %52, %59 : vector<32x1xf32>
    %61 = vector.extract_strided_slice %18 {offsets = [0, 0], sizes = [32, 16], strides = [1, 1]} : vector<32x64xf32> to vector<32x16xf32>
    %62 = vector.extract_strided_slice %18 {offsets = [0, 48], sizes = [32, 16], strides = [1, 1]} : vector<32x64xf32> to vector<32x16xf32>
    %63 = arith.subf %61, %62 : vector<32x16xf32>
    %64 = arith.mulf %63, %63 : vector<32x16xf32>
    %cst_16 = arith.constant dense<0.000000e+00> : vector<32xf32>
    %65 = vector.multi_reduction <add>, %64, %cst_16 [1] : vector<32x16xf32> to vector<32xf32>
    %66 = vector.shape_cast %65 : vector<32xf32> to vector<32x1xf32>
    %67 = math.sqrt %66 : vector<32x1xf32>
    %68 = arith.addf %60, %67 : vector<32x1xf32>
    %69 = vector.extract_strided_slice %18 {offsets = [0, 16], sizes = [32, 16], strides = [1, 1]} : vector<32x64xf32> to vector<32x16xf32>
    %70 = vector.extract_strided_slice %18 {offsets = [0, 32], sizes = [32, 16], strides = [1, 1]} : vector<32x64xf32> to vector<32x16xf32>
    %71 = arith.subf %69, %70 : vector<32x16xf32>
    %72 = arith.mulf %71, %71 : vector<32x16xf32>
    %cst_17 = arith.constant dense<0.000000e+00> : vector<32xf32>
    %73 = vector.multi_reduction <add>, %72, %cst_17 [1] : vector<32x16xf32> to vector<32xf32>
    %74 = vector.shape_cast %73 : vector<32xf32> to vector<32x1xf32>
    %75 = math.sqrt %74 : vector<32x1xf32>
    %76 = arith.addf %68, %75 : vector<32x1xf32>
    %77 = vector.extract_strided_slice %18 {offsets = [0, 16], sizes = [32, 16], strides = [1, 1]} : vector<32x64xf32> to vector<32x16xf32>
    %78 = vector.extract_strided_slice %18 {offsets = [0, 48], sizes = [32, 16], strides = [1, 1]} : vector<32x64xf32> to vector<32x16xf32>
    %79 = arith.subf %77, %78 : vector<32x16xf32>
    %80 = arith.mulf %79, %79 : vector<32x16xf32>
    %cst_18 = arith.constant dense<0.000000e+00> : vector<32xf32>
    %81 = vector.multi_reduction <add>, %80, %cst_18 [1] : vector<32x16xf32> to vector<32xf32>
    %82 = vector.shape_cast %81 : vector<32xf32> to vector<32x1xf32>
    %83 = math.sqrt %82 : vector<32x1xf32>
    %84 = arith.addf %76, %83 : vector<32x1xf32>
    %85 = vector.extract_strided_slice %18 {offsets = [0, 32], sizes = [32, 16], strides = [1, 1]} : vector<32x64xf32> to vector<32x16xf32>
    %86 = vector.extract_strided_slice %18 {offsets = [0, 48], sizes = [32, 16], strides = [1, 1]} : vector<32x64xf32> to vector<32x16xf32>
    %87 = arith.subf %85, %86 : vector<32x16xf32>
    %88 = arith.mulf %87, %87 : vector<32x16xf32>
    %cst_19 = arith.constant dense<0.000000e+00> : vector<32xf32>
    %89 = vector.multi_reduction <add>, %88, %cst_19 [1] : vector<32x16xf32> to vector<32xf32>
    %90 = vector.shape_cast %89 : vector<32xf32> to vector<32x1xf32>
    %91 = math.sqrt %90 : vector<32x1xf32>
    %92 = arith.addf %84, %91 : vector<32x1xf32>
    %cst_20 = arith.constant dense<0.000000e+00> : vector<1xf32>
    %93 = vector.multi_reduction <add>, %92, %cst_20 [0] : vector<32x1xf32> to vector<1xf32>
    %94 = vector.shape_cast %93 : vector<1xf32> to vector<1x1xf32>
    %cst_21 = arith.constant 0.00520833349 : f32
    %95 = vector.broadcast %cst_21 : f32 to vector<1x1xf32>
    %96 = arith.mulf %94, %95 : vector<1x1xf32>
    %97 = arith.cmpf one, %43, %43 : vector<1x1xf32>
    %cst_22 = arith.constant 0.899999976 : f32
    %98 = vector.broadcast %cst_22 : f32 to vector<1x1xf32>
    %99 = arith.mulf %98, %43 : vector<1x1xf32>
    %cst_23 = arith.constant 1.000000e-01 : f32
    %100 = vector.broadcast %cst_23 : f32 to vector<1x1xf32>
    %101 = arith.mulf %100, %96 : vector<1x1xf32>
    %102 = arith.addf %99, %101 : vector<1x1xf32>
    %103 = arith.select %97, %96, %102 : vector<1x1xi1>, vector<1x1xf32>
    %104 = arith.cmpf one, %103, %103 : vector<1x1xf32>
    %cst_24 = arith.constant 1.000000e+00 : f32
    %105 = vector.broadcast %cst_24 : f32 to vector<1x1xf32>
    %cst_25 = arith.constant 1.000000e+00 : f32
    %106 = vector.broadcast %cst_25 : f32 to vector<1x1xf32>
    %107 = arith.divf %106, %103 : vector<1x1xf32>
    %108 = arith.select %104, %105, %107 : vector<1x1xi1>, vector<1x1xf32>
    %109 = vector.broadcast %108 : vector<1x1xf32> to vector<32x16xf32>
    %110 = arith.mulf %41, %109 : vector<32x16xf32>
    %111 = arith.addf %19, %110 : vector<32x16xf32>
    %c0_26 = arith.constant 0 : index
    %c0_27 = arith.constant 0 : index
    %112 = vector.load %arg3[%c0_26, %c0_27] : memref<32x18xf32, #tpu.memory_space<vmem>>, vector<32x16xf32>
    tpu.vector_store %arg3[%c0_26, %c0_27], %111 {strides = array<i32>} : memref<32x18xf32, #tpu.memory_space<vmem>>, vector<32x16xf32>,
    %113 = arith.mulf %111, %111 : vector<32x16xf32>
    %cst_28 = arith.constant dense<0.000000e+00> : vector<32xf32>
    %114 = vector.multi_reduction <add>, %113, %cst_28 [1] : vector<32x16xf32> to vector<32xf32>
    %115 = vector.shape_cast %114 : vector<32xf32> to vector<32x1xf32>
    %116 = math.sqrt %115 : vector<32x1xf32>
    %c0_29 = arith.constant 0 : index
    %c16 = arith.constant 16 : index
    %117 = vector.load %arg3[%c0_29, %c16] : memref<32x18xf32, #tpu.memory_space<vmem>>, vector<32x1xf32>
    tpu.vector_store %arg3[%c0_29, %c16], %116 {strides = array<i32>} : memref<32x18xf32, #tpu.memory_space<vmem>>, vector<32x1xf32>,
    %118 = vector.shape_cast %103 : vector<1x1xf32> to vector<1x1xf32>
    %119 = vector.broadcast %118 : vector<1x1xf32> to vector<32x1xf32>
    %c0_30 = arith.constant 0 : index
    %c17 = arith.constant 17 : index
    %120 = vector.load %arg3[%c0_30, %c17] : memref<32x18xf32, #tpu.memory_space<vmem>>, vector<32x1xf32>
    tpu.vector_store %arg3[%c0_30, %c17], %119 {strides = array<i32>} : memref<32x18xf32, #tpu.memory_space<vmem>>, vector<32x1xf32>,
    return
  }
}

</mosaic_0001>

<llo_original>
// kernel: squeeze.2
$region0: #{squeeze.2}
  %s0 = inlined_call_operand.vmem [shape: f32[32], index: 0, kind: input, shape index: {}]
  %s1 = inlined_call_operand.vmem [shape: f32[8,4], index: 1, kind: output, shape index: {}]
  $region1: #{squeeze.2} parent=0
    #allocation0 [shape = 'u8[4096]{0}', space=vmem, size = 0x1000, scoped, tag = 'scoped mem for input reshape']
    %s3 = sshll.u32 1, 1
    %s4 = ssub.s32 %s3, 1
    %v5 = vld [vmem:[%s0] sm:%s4]
    %6 = vst [vmem:[#allocation0] sm:%s4] %v5
    %v7 = vld [vmem:[#allocation0] sm:$0x1]
    %vm8 = vcmask 31744
    %9 = vst.msk [vmem:[%s1] sm:$0x1] %vm8, %v7
    %v10 = vld [vmem:[#allocation0] sm:$0x1]
    %11 = vrot.lane.b32.xlu0 %v10, 124
    %v12 = vpop.permute.xlu0 %11
    %vm13 = vcmask 31744
    %s14 = scalar_lea.vmem %s1, 1
    %15 = vst.msk [vmem:[%s14] sm:$0x1] %vm13, %v12
    %v16 = vld [vmem:[#allocation0] sm:$0x1]
    %17 = vrot.lane.b32.xlu0 %v16, 120
    %v18 = vpop.permute.xlu0 %17
    %vm19 = vcmask 31744
    %s20 = scalar_lea.vmem %s1, 2
    %21 = vst.msk [vmem:[%s20] sm:$0x1] %vm19, %v18
    %v22 = vld [vmem:[#allocation0] sm:$0x1]
    %23 = vrot.lane.b32.xlu0 %v22, 116
    %v24 = vpop.permute.xlu0 %23
    %vm25 = vcmask 31744
    %s26 = scalar_lea.vmem %s1, 3
    %27 = vst.msk [vmem:[%s26] sm:$0x1] %vm25, %v24
    %v28 = vld [vmem:[#allocation0] sm:$0x1]
    %29 = vrot.lane.b32.xlu0 %v28, 112
    %v30 = vpop.permute.xlu0 %29
    %vm31 = vcmask 31744
    %s32 = scalar_lea.vmem %s1, 4
    %33 = vst.msk [vmem:[%s32] sm:$0x1] %vm31, %v30
    %v34 = vld [vmem:[#allocation0] sm:$0x1]
    %35 = vrot.lane.b32.xlu0 %v34, 108
    %v36 = vpop.permute.xlu0 %35
    %vm37 = vcmask 31744
    %s38 = scalar_lea.vmem %s1, 5
    %39 = vst.msk [vmem:[%s38] sm:$0x1] %vm37, %v36
    %v40 = vld [vmem:[#allocation0] sm:$0x1]
    %41 = vrot.lane.b32.xlu0 %v40, 104
    %v42 = vpop.permute.xlu0 %41
    %vm43 = vcmask 31744
    %s44 = scalar_lea.vmem %s1, 6
    %45 = vst.msk [vmem:[%s44] sm:$0x1] %vm43, %v42
    %v46 = vld [vmem:[#allocation0] sm:$0x1]
    %47 = vrot.lane.b32.xlu0 %v46, 100
    %v48 = vpop.permute.xlu0 %47
    %vm49 = vcmask 31744
    %s50 = scalar_lea.vmem %s1, 7
    %51 = vst.msk [vmem:[%s50] sm:$0x1] %vm49, %v48

// kernel: het_control_forward.1
$region0: #{het_control_forward.1}
  #allocation0 [shape = 'u32[]', space=smem, size = 0x4, offset = 0x4, fixed_abs, tag = 'smem constant byte address 0x4 - core index']
  #allocation1 [shape = 'u32[144,128]{1,0:T(1,128)}', space=vmem, size = 0x12000, scoped, tag = 'internal scratch']
  #allocation2 [shape = 'f32[1]{0:T(128)S(6)}', space=smem, size = 0x200, scoped, tag = 'scoped memory for het_control_forward.1']
  %s0 = inlined_call_operand.vmem [shape: f32[32,32], index: 0, kind: input, shape index: {}]
  %s1 = inlined_call_operand.vmem [shape: f32[376,160], index: 1, kind: input, shape index: {}]
  %s2 = inlined_call_operand.<no memory space> [shape: f32[1], index: 2, kind: input, shape index: {}]
  %s3 = inlined_call_operand.vmem [shape: f32[32,18], index: 3, kind: output, shape index: {}]
  %s4 = sld [smem:[#allocation0]]
  $region22: #{het_control_forward.1} parent=0
    _
  %s6 = ssub.s32 1, %s4
  %s7 = scalar_select 0, %s6, %s4
  %8 = sst [smem:[#allocation2]] %s2
  // Predicated region
  $region2: #{het_control_forward.1} parent=0 // pred_check
    _
  $region3: #{het_control_forward.1} parent=0 // pred_check_branch
    %10 = sbr.rel (0) target = $region5
  $region4: #{het_control_forward.1} parent=0 // pred_region
    _
  $region5: #{het_control_forward.1} parent=0 // pred_fallthru
    _
  // Predicated region
  $region6: #{het_control_forward.1} parent=0 // pred_check
    _
  $region7: #{het_control_forward.1} parent=0 // pred_check_branch
    %12 = sbr.rel (0) target = $region9
  $region8: #{het_control_forward.1} parent=0 // pred_region
    _
  $region9: #{het_control_forward.1} parent=0 // pred_fallthru
    _
  // Predicated region
  $region10: #{het_control_forward.1} parent=0 // pred_check
    _
  $region11: #{het_control_forward.1} parent=0 // pred_check_branch
    %14 = sbr.rel (0) target = $region13
  $region12: #{het_control_forward.1} parent=0 // pred_region
    _
  $region13: #{het_control_forward.1} parent=0 // pred_fallthru
    _
  %v15 = vld [vmem:[%s0] sm:$0xff]
  %v16 = vld [vmem:[%s0 + $0x8] sm:$0xff]
  %v17 = vld [vmem:[%s0 + $0x10] sm:$0xff]
  %v18 = vld [vmem:[%s0 + $0x18] sm:$0xff]
  %v19 = vld [vmem:[%s1] sm:$0xff]
  %v20 = vld [vmem:[%s1 + $0x8] sm:$0xff]
  %v21 = vld [vmem:[%s1 + $0x10] sm:$0xff]
  %v22 = vld [vmem:[%s1 + $0x18] sm:$0xff]
  %v23 = vld [vmem:[%s1 + $0x20] sm:$0xff]
  %v24 = vld [vmem:[%s1 + $0x28] sm:$0xff]
  %v25 = vld [vmem:[%s1 + $0x30] sm:$0xff]
  %v26 = vld [vmem:[%s1 + $0x38] sm:$0xff]
  %v27 = vld [vmem:[%s1 + $0x40] sm:$0xff]
  %v28 = vld [vmem:[%s1 + $0x48] sm:$0xff]
  %v29 = vld [vmem:[%s1 + $0x50] sm:$0xff]
  %v30 = vld [vmem:[%s1 + $0x58] sm:$0xff]
  %v31 = vld [vmem:[%s1 + $0x60] sm:$0xff]
  %v32 = vld [vmem:[%s1 + $0x68] sm:$0xff]
  %v33 = vld [vmem:[%s1 + $0x70] sm:$0xff]
  %v34 = vld [vmem:[%s1 + $0x78] sm:$0xff]
  %v35 = vld [vmem:[%s1 + $0x80] sm:$0xff]
  %v36 = vld [vmem:[%s1 + $0x88] sm:$0xff]
  %v37 = vld [vmem:[%s1 + $0x90] sm:$0xff]
  %v38 = vld [vmem:[%s1 + $0x98] sm:$0xff]
  %v39 = vld [vmem:[%s1 + $0xa0] sm:$0xff]
  %v40 = vld [vmem:[%s1 + $0xa8] sm:$0xff]
  %v41 = vld [vmem:[%s1 + $0xb0] sm:$0xff]
  %v42 = vld [vmem:[%s1 + $0xb8] sm:$0xff]
  %v43 = vld [vmem:[%s1 + $0xc0] sm:$0xff]
  %v44 = vld [vmem:[%s1 + $0xc8] sm:$0xff]
  %v45 = vld [vmem:[%s1 + $0xd0] sm:$0xff]
  %v46 = vld [vmem:[%s1 + $0xd8] sm:$0xff]
  %v47 = vld [vmem:[%s1 + $0xe0] sm:$0xff]
  %v48 = vld [vmem:[%s1 + $0xe8] sm:$0xff]
  %v49 = vld [vmem:[%s1 + $0xf0] sm:$0xff]
  %v50 = vld [vmem:[%s1 + $0xf8] sm:$0xff]
  %v51 = vld [vmem:[%s1 + $0x100] sm:$0xff]
  %v52 = vld [vmem:[%s1 + $0x108] sm:$0xff]
  %v53 = vld [vmem:[%s1 + $0x110] sm:$0xff]
  %v54 = vld [vmem:[%s1 + $0x118] sm:$0xff]
  %v55 = vld [vmem:[%s1 + $0x120] sm:$0xff]
  %v56 = vld [vmem:[%s1 + $0x128] sm:$0xff]
  %v57 = vld [vmem:[%s1 + $0x130] sm:$0xff]
  %v58 = vld [vmem:[%s1 + $0x138] sm:$0xff]
  %v59 = vld [vmem:[%s1 + $0x140] sm:$0xff]
  %v60 = vld [vmem:[%s1 + $0x148] sm:$0xff]
  %v61 = vld [vmem:[%s1 + $0x150] sm:$0xff]
  %v62 = vld [vmem:[%s1 + $0x158] sm:$0xff]
  %v63 = vld [vmem:[%s1 + $0x160] sm:$0xff]
  %v64 = vld [vmem:[%s1 + $0x168] sm:$0xff]
  %v65 = vld [vmem:[%s1 + $0x170] sm:$0xff]
  %v66 = vld [vmem:[%s1 + $0x178] sm:$0xff]
  %v67 = vld [vmem:[%s1 + $0x180] sm:$0xff]
  %v68 = vld [vmem:[%s1 + $0x190] sm:$0xff]
  %v69 = vld [vmem:[%s1 + $0x1a0] sm:$0xff]
  %v70 = vld [vmem:[%s1 + $0x1b0] sm:$0xff]
  %v71 = vld [vmem:[%s1 + $0x1c0] sm:$0xff]
  %v72 = vld [vmem:[%s1 + $0x1d0] sm:$0xff]
  %v73 = vld [vmem:[%s1 + $0x1e0] sm:$0xff]
  %v74 = vld [vmem:[%s1 + $0x1f0] sm:$0xff]
  %v75 = vld [vmem:[%s1 + $0x200] sm:$0xff]
  %v76 = vld [vmem:[%s1 + $0x210] sm:$0xff]
  %v77 = vld [vmem:[%s1 + $0x220] sm:$0xff]
  %v78 = vld [vmem:[%s1 + $0x230] sm:$0xff]
  %v79 = vld [vmem:[%s1 + $0x240] sm:$0xff]
  %v80 = vld [vmem:[%s1 + $0x250] sm:$0xff]
  %v81 = vld [vmem:[%s1 + $0x260] sm:$0xff]
  %v82 = vld [vmem:[%s1 + $0x270] sm:$0xff]
  %v83 = vld [vmem:[%s1 + $0x280] sm:$0xff]
  %v84 = vld [vmem:[%s1 + $0x290] sm:$0xff]
  %v85 = vld [vmem:[%s1 + $0x2a0] sm:$0xff]
  %v86 = vld [vmem:[%s1 + $0x2b0] sm:$0xff]
  %s87 = scalar_lea.vmem %s1, 704
  %v88 = vld [vmem:[%s87] ss:$8 sm:$0x3]
  %s89 = scalar_lea.vmem %s1, 720
  %v90 = vld [vmem:[%s89] ss:$8 sm:$0x3]
  %v91 = vld [vmem:[%s1 + $0x2e0] ss:$0 sm:$0xff]
  %v93 = vlaneseq
  %v94 = vshrl.u32 %v93, 7
  %v95 = vsub.s32 0, %v94
  %v96 = vrot.slane %v88, %v95
  %v97 = vlaneseq
  %v98 = vshrl.u32 %v97, 7
  %v99 = vsub.s32 1, %v98
  %v100 = vrot.slane %v88, %v99
  %vm103 = vcmask 261120
  %v105 = vsel %vm103, %v15, 0
  %v108 = vsel %vm103, %v16, 0
  %v111 = vsel %vm103, %v17, 0
  %v114 = vsel %vm103, %v18, 0
  %116 = vmatprep.subr.mxu0 0.0
  %117 = vmatpush1.msra.mxu0 0.0
  %118 = vmatprep.subr.mxu0 0.0
  %119 = vmatpush1.msra.mxu0 0.0
  %120 = vmatprep.subr.mxu0 0.0
  %121 = vmatpush1.msra.mxu0 0.0
  %122 = vmatprep.subr.mxu0 0.0
  %123 = vmatpush1.msra.mxu0 0.0
  %124 = vmatprep.subr.mxu0 0.0
  %125 = vmatpush1.msra.mxu0 0.0
  %126 = vmatprep.subr.mxu0 0.0
  %127 = vmatpush1.msra.mxu0 0.0
  %128 = vmatprep.subr.mxu0 0.0
  %129 = vmatpush1.msra.mxu0 0.0
  %130 = vmatprep.subr.mxu0 0.0
  %131 = vmatpush1.msra.mxu0 0.0
  %132 = vmatprep.subr.mxu0 0.0
  %133 = vmatpush1.msra.mxu0 0.0
  %134 = vmatprep.subr.mxu0 0.0
  %135 = vmatpush1.msra.mxu0 0.0
  %136 = vmatprep.subr.mxu0 0.0
  %137 = vmatpush1.msra.mxu0 0.0
  %138 = vmatprep.subr.mxu0 0.0
  %139 = vmatpush1.msra.mxu0 0.0
  %140 = vmatprep.subr.mxu0 %v26
  %141 = vmatpush1.msra.mxu0 %v25
  %142 = vmatprep.subr.mxu0 %v24
  %143 = vmatpush1.msra.mxu0 %v23
  %144 = vmatprep.subr.mxu0 %v22
  %145 = vmatpush1.msra.mxu0 %v21
  %146 = vmatprep.subr.mxu0 %v20
  %147 = vmatpush1.msra.mxu0 %v19
  %148 = vmatprep.subr.mxu0 0.0
  %149 = vmatpush2.msra.mxu0 0.0
  %150 = vmatprep.subr.mxu0 0.0
  %151 = vmatpush2.msra.mxu0 0.0
  %152 = vmatprep.subr.mxu0 0.0
  %153 = vmatpush2.msra.mxu0 0.0
  %154 = vmatprep.subr.mxu0 0.0
  %155 = vmatpush2.msra.mxu0 0.0
  %156 = vmatprep.subr.mxu0 0.0
  %157 = vmatpush2.msra.mxu0 0.0
  %158 = vmatprep.subr.mxu0 0.0
  %159 = vmatpush2.msra.mxu0 0.0
  %160 = vmatprep.subr.mxu0 0.0
  %161 = vmatpush2.msra.mxu0 0.0
  %162 = vmatprep.subr.mxu0 0.0
  %163 = vmatpush2.msra.mxu0 0.0
  %164 = vmatprep.subr.mxu0 0.0
  %165 = vmatpush2.msra.mxu0 0.0
  %166 = vmatprep.subr.mxu0 0.0
  %167 = vmatpush2.msra.mxu0 0.0
  %168 = vmatprep.subr.mxu0 0.0
  %169 = vmatpush2.msra.mxu0 0.0
  %170 = vmatprep.subr.mxu0 0.0
  %171 = vmatpush2.msra.mxu0 0.0
  %172 = vmatprep.subr.mxu0 0.0
  %173 = vmatpush2.msra.mxu0 0.0
  %174 = vmatprep.subr.mxu0 0.0
  %175 = vmatpush2.msra.mxu0 0.0
  %176 = vmatprep.subr.mxu0 0.0
  %177 = vmatpush2.msra.mxu0 0.0
  %178 = vmatprep.subr.mxu0 0.0
  %179 = vmatpush2.msra.mxu0 0.0
  %180 = vmatprep.mubr.f32.mxu0 0.0
  %181 = vmatmul.mubr.f32.gmra.mxu0 %v105
  %v182 = vpop.f32.mrf.mxu0
  %v183 = vadd.f32 %v96, %v182
  %v184 = vpop.f32.mrf.mxu0
  %v185 = vadd.f32 %v100, %v184
  %186 = vmatprep.mubr.f32.mxu0 0.0
  %187 = vmatmul.mubr.f32.gmra.mxu0 %v108
  %v188 = vpop.f32.mrf.mxu0
  %v189 = vadd.f32 %v96, %v188
  %v190 = vpop.f32.mrf.mxu0
  %v191 = vadd.f32 %v100, %v190
  %192 = vmatprep.mubr.f32.mxu0 0.0
  %193 = vmatmul.mubr.f32.gmra.mxu0 %v111
  %v194 = vpop.f32.mrf.mxu0
  %v195 = vadd.f32 %v96, %v194
  %v196 = vpop.f32.mrf.mxu0
  %v197 = vadd.f32 %v100, %v196
  %198 = vmatprep.mubr.f32.mxu0 0.0
  %199 = vmatmul.mubr.f32.gmra.mxu0 %v114
  %v200 = vpop.f32.mrf.mxu0
  %v201 = vadd.f32 %v96, %v200
  %v202 = vpop.f32.mrf.mxu0
  %v203 = vadd.f32 %v100, %v202
  %204 = vdwg.mxu0
  %v205 = vtanh.pop %v183
  %v206 = vtanh.pop %v185
  %v207 = vtanh.pop %v189
  %v208 = vtanh.pop %v191
  %v209 = vtanh.pop %v195
  %v210 = vtanh.pop %v197
  %v211 = vtanh.pop %v201
  %v212 = vtanh.pop %v203
  %v214 = vlaneseq
  %v215 = vshrl.u32 %v214, 7
  %v216 = vsub.s32 0, %v215
  %v217 = vrot.slane %v90, %v216
  %v218 = vlaneseq
  %v219 = vshrl.u32 %v218, 7
  %v220 = vsub.s32 1, %v219
  %v221 = vrot.slane %v90, %v220
  %v225 = vsel %vm103, %v206, 0
  %v228 = vsel %vm103, %v208, 0
  %v231 = vsel %vm103, %v210, 0
  %v234 = vsel %vm103, %v212, 0
  %236 = vmatprep.subr.mxu0 %v58
  %237 = vmatpush1.msra.mxu0 %v57
  %238 = vmatprep.subr.mxu0 %v56
  %239 = vmatpush1.msra.mxu0 %v55
  %240 = vmatprep.subr.mxu0 %v54
  %241 = vmatpush1.msra.mxu0 %v53
  %242 = vmatprep.subr.mxu0 %v52
  %243 = vmatpush1.msra.mxu0 %v51
  %244 = vmatprep.subr.mxu0 %v50
  %245 = vmatpush1.msra.mxu0 %v49
  %246 = vmatprep.subr.mxu0 %v48
  %247 = vmatpush1.msra.mxu0 %v47
  %248 = vmatprep.subr.mxu0 %v46
  %249 = vmatpush1.msra.mxu0 %v45
  %250 = vmatprep.subr.mxu0 %v44
  %251 = vmatpush1.msra.mxu0 %v43
  %252 = vmatprep.subr.mxu0 %v42
  %253 = vmatpush1.msra.mxu0 %v41
  %254 = vmatprep.subr.mxu0 %v40
  %255 = vmatpush1.msra.mxu0 %v39
  %256 = vmatprep.subr.mxu0 %v38
  %257 = vmatpush1.msra.mxu0 %v37
  %258 = vmatprep.subr.mxu0 %v36
  %259 = vmatpush1.msra.mxu0 %v35
  %260 = vmatprep.subr.mxu0 %v34
  %261 = vmatpush1.msra.mxu0 %v33
  %262 = vmatprep.subr.mxu0 %v32
  %263 = vmatpush1.msra.mxu0 %v31
  %264 = vmatprep.subr.mxu0 %v30
  %265 = vmatpush1.msra.mxu0 %v29
  %266 = vmatprep.subr.mxu0 %v28
  %267 = vmatpush1.msra.mxu0 %v27
  %268 = vmatprep.subr.mxu0 0.0
  %269 = vmatpush2.msra.mxu0 0.0
  %270 = vmatprep.subr.mxu0 0.0
  %271 = vmatpush2.msra.mxu0 0.0
  %272 = vmatprep.subr.mxu0 0.0
  %273 = vmatpush2.msra.mxu0 0.0
  %274 = vmatprep.subr.mxu0 0.0
  %275 = vmatpush2.msra.mxu0 0.0
  %276 = vmatprep.subr.mxu0 0.0
  %277 = vmatpush2.msra.mxu0 0.0
  %278 = vmatprep.subr.mxu0 0.0
  %279 = vmatpush2.msra.mxu0 0.0
  %280 = vmatprep.subr.mxu0 0.0
  %281 = vmatpush2.msra.mxu0 0.0
  %282 = vmatprep.subr.mxu0 0.0
  %283 = vmatpush2.msra.mxu0 0.0
  %284 = vmatprep.subr.mxu0 0.0
  %285 = vmatpush2.msra.mxu0 0.0
  %286 = vmatprep.subr.mxu0 0.0
  %287 = vmatpush2.msra.mxu0 0.0
  %288 = vmatprep.subr.mxu0 0.0
  %289 = vmatpush2.msra.mxu0 0.0
  %290 = vmatprep.subr.mxu0 0.0
  %291 = vmatpush2.msra.mxu0 0.0
  %292 = vmatprep.subr.mxu0 %v66
  %293 = vmatpush2.msra.mxu0 %v65
  %294 = vmatprep.subr.mxu0 %v64
  %295 = vmatpush2.msra.mxu0 %v63
  %296 = vmatprep.subr.mxu0 %v62
  %297 = vmatpush2.msra.mxu0 %v61
  %298 = vmatprep.subr.mxu0 %v60
  %299 = vmatpush2.msra.mxu0 %v59
  %300 = vmatprep.mubr.f32.mxu0 %v225
  %301 = vmatmul.mubr.f32.gmra.mxu0 %v205
  %v302 = vpop.f32.mrf.mxu0
  %v303 = vadd.f32 %v217, %v302
  %v304 = vpop.f32.mrf.mxu0
  %v305 = vadd.f32 %v221, %v304
  %306 = vmatprep.mubr.f32.mxu0 %v228
  %307 = vmatmul.mubr.f32.gmra.mxu0 %v207
  %v308 = vpop.f32.mrf.mxu0
  %v309 = vadd.f32 %v217, %v308
  %v310 = vpop.f32.mrf.mxu0
  %v311 = vadd.f32 %v221, %v310
  %312 = vmatprep.mubr.f32.mxu0 %v231
  %313 = vmatmul.mubr.f32.gmra.mxu0 %v209
  %v314 = vpop.f32.mrf.mxu0
  %v315 = vadd.f32 %v217, %v314
  %v316 = vpop.f32.mrf.mxu0
  %v317 = vadd.f32 %v221, %v316
  %318 = vmatprep.mubr.f32.mxu0 %v234
  %319 = vmatmul.mubr.f32.gmra.mxu0 %v211
  %v320 = vpop.f32.mrf.mxu0
  %v321 = vadd.f32 %v217, %v320
  %v322 = vpop.f32.mrf.mxu0
  %v323 = vadd.f32 %v221, %v322
  %324 = vdwg.mxu0
  %v325 = vtanh.pop %v303
  %v326 = vtanh.pop %v305
  %v327 = vtanh.pop %v309
  %v328 = vtanh.pop %v311
  %v329 = vtanh.pop %v315
  %v330 = vtanh.pop %v317
  %v331 = vtanh.pop %v321
  %v332 = vtanh.pop %v323
  %v334 = vsel %vm103, %v326, 0
  %v337 = vsel %vm103, %v328, 0
  %v340 = vsel %vm103, %v330, 0
  %v343 = vsel %vm103, %v332, 0
  %345 = vmatprep.subr.mxu0 0.0
  %346 = vmatpush1.msra.mxu0 %v82
  %347 = vmatprep.subr.mxu0 0.0
  %348 = vmatpush1.msra.mxu0 %v81
  %349 = vmatprep.subr.mxu0 0.0
  %350 = vmatpush1.msra.mxu0 %v80
  %351 = vmatprep.subr.mxu0 0.0
  %352 = vmatpush1.msra.mxu0 %v79
  %353 = vmatprep.subr.mxu0 0.0
  %354 = vmatpush1.msra.mxu0 %v78
  %355 = vmatprep.subr.mxu0 0.0
  %356 = vmatpush1.msra.mxu0 %v77
  %357 = vmatprep.subr.mxu0 0.0
  %358 = vmatpush1.msra.mxu0 %v76
  %359 = vmatprep.subr.mxu0 0.0
  %360 = vmatpush1.msra.mxu0 %v75
  %361 = vmatprep.subr.mxu0 0.0
  %362 = vmatpush1.msra.mxu0 %v74
  %363 = vmatprep.subr.mxu0 0.0
  %364 = vmatpush1.msra.mxu0 %v73
  %365 = vmatprep.subr.mxu0 0.0
  %366 = vmatpush1.msra.mxu0 %v72
  %367 = vmatprep.subr.mxu0 0.0
  %368 = vmatpush1.msra.mxu0 %v71
  %369 = vmatprep.subr.mxu0 0.0
  %370 = vmatpush1.msra.mxu0 %v70
  %371 = vmatprep.subr.mxu0 0.0
  %372 = vmatpush1.msra.mxu0 %v69
  %373 = vmatprep.subr.mxu0 0.0
  %374 = vmatpush1.msra.mxu0 %v68
  %375 = vmatprep.subr.mxu0 0.0
  %376 = vmatpush1.msra.mxu0 %v67
  %377 = vmatprep.subr.mxu0 0.0
  %378 = vmatpush2.msra.mxu0 0.0
  %379 = vmatprep.subr.mxu0 0.0
  %380 = vmatpush2.msra.mxu0 0.0
  %381 = vmatprep.subr.mxu0 0.0
  %382 = vmatpush2.msra.mxu0 0.0
  %383 = vmatprep.subr.mxu0 0.0
  %384 = vmatpush2.msra.mxu0 0.0
  %385 = vmatprep.subr.mxu0 0.0
  %386 = vmatpush2.msra.mxu0 0.0
  %387 = vmatprep.subr.mxu0 0.0
  %388 = vmatpush2.msra.mxu0 0.0
  %389 = vmatprep.subr.mxu0 0.0
  %390 = vmatpush2.msra.mxu0 0.0
  %391 = vmatprep.subr.mxu0 0.0
  %392 = vmatpush2.msra.mxu0 0.0
  %393 = vmatprep.subr.mxu0 0.0
  %394 = vmatpush2.msra.mxu0 0.0
  %395 = vmatprep.subr.mxu0 0.0
  %396 = vmatpush2.msra.mxu0 0.0
  %397 = vmatprep.subr.mxu0 0.0
  %398 = vmatpush2.msra.mxu0 0.0
  %399 = vmatprep.subr.mxu0 0.0
  %400 = vmatpush2.msra.mxu0 0.0
  %401 = vmatprep.subr.mxu0 0.0
  %402 = vmatpush2.msra.mxu0 %v86
  %403 = vmatprep.subr.mxu0 0.0
  %404 = vmatpush2.msra.mxu0 %v85
  %405 = vmatprep.subr.mxu0 0.0
  %406 = vmatpush2.msra.mxu0 %v84
  %407 = vmatprep.subr.mxu0 0.0
  %408 = vmatpush2.msra.mxu0 %v83
  %409 = vmatprep.mubr.f32.mxu0 %v334
  %410 = vmatmul.mubr.f32.gmra.mxu0 %v325
  %v411 = vpop.f32.mrf.mxu0
  %v412 = vadd.f32 %v91, %v411
  %v413 = vpop.f32.mrf.mxu0
  %414 = vmatprep.mubr.f32.mxu0 %v337
  %415 = vmatmul.mubr.f32.gmra.mxu0 %v327
  %v416 = vpop.f32.mrf.mxu0
  %v417 = vadd.f32 %v91, %v416
  %v418 = vpop.f32.mrf.mxu0
  %419 = vmatprep.mubr.f32.mxu0 %v340
  %420 = vmatmul.mubr.f32.gmra.mxu0 %v329
  %v421 = vpop.f32.mrf.mxu0
  %v422 = vadd.f32 %v91, %v421
  %v423 = vpop.f32.mrf.mxu0
  %424 = vmatprep.mubr.f32.mxu0 %v343
  %425 = vmatmul.mubr.f32.gmra.mxu0 %v331
  %v426 = vpop.f32.mrf.mxu0
  %v427 = vadd.f32 %v91, %v426
  %v428 = vpop.f32.mrf.mxu0
  %429 = vdwg.mxu0
  %v430 = vlaneseq
  %v431 = vshrl.u32 %v430, 7
  %v432 = vadd.s32 %v431, 8
  %v433 = vadd.s32 %v431, 16
  %v434 = vadd.s32 %v431, 24
  %v435 = vand.u32 %v431, 3
  %v436 = vand.u32 %v432, 3
  %v437 = vand.u32 %v433, 3
  %v438 = vand.u32 %v434, 3
  %v439 = vlaneseq
  %v440 = vand.u32 %v439, 127
  %v441 = vmul.u32 %v435, 16
  %v442 = vmul.u32 %v436, 16
  %v443 = vmul.u32 %v437, 16
  %v444 = vmul.u32 %v438, 16
  %vm445 = vcmp.ge.s32.totalorder %v440, %v441
  %vm446 = vcmp.ge.s32.totalorder %v440, %v442
  %vm447 = vcmp.ge.s32.totalorder %v440, %v443
  %vm448 = vcmp.ge.s32.totalorder %v440, %v444
  %v449 = vadd.s32 %v441, 16
  %v450 = vadd.s32 %v442, 16
  %v451 = vadd.s32 %v443, 16
  %v452 = vadd.s32 %v444, 16
  %vm453 = vcmp.lt.s32.totalorder %v440, %v449
  %vm454 = vcmp.lt.s32.totalorder %v440, %v450
  %vm455 = vcmp.lt.s32.totalorder %v440, %v451
  %vm456 = vcmp.lt.s32.totalorder %v440, %v452
  %vm457 = vmand %vm445, %vm453
  %vm458 = vmand %vm446, %vm454
  %vm459 = vmand %vm447, %vm455
  %vm460 = vmand %vm448, %vm456
  %v461 = vsel %vm457, %v412, 0.0
  %v462 = vsel %vm458, %v417, 0.0
  %v463 = vsel %vm459, %v422, 0.0
  %v464 = vsel %vm460, %v427, 0.0
  %469 = vrot.lane.b32.xlu0 %v461, 112
  %v470 = vpop.permute.xlu0 %469
  %471 = vrot.lane.b32.xlu0 %v462, 112
  %v472 = vpop.permute.xlu0 %471
  %473 = vrot.lane.b32.xlu0 %v463, 112
  %v474 = vpop.permute.xlu0 %473
  %475 = vrot.lane.b32.xlu0 %v464, 112
  %v476 = vpop.permute.xlu0 %475
  %v481 = vadd.f32 %v461, %v470
  %v482 = vadd.f32 %v462, %v472
  %v483 = vadd.f32 %v463, %v474
  %v484 = vadd.f32 %v464, %v476
  %485 = vrot.lane.b32.xlu0 %v461, 96
  %v486 = vpop.permute.xlu0 %485
  %487 = vrot.lane.b32.xlu0 %v462, 96
  %v488 = vpop.permute.xlu0 %487
  %489 = vrot.lane.b32.xlu0 %v463, 96
  %v490 = vpop.permute.xlu0 %489
  %491 = vrot.lane.b32.xlu0 %v464, 96
  %v492 = vpop.permute.xlu0 %491
  %v497 = vadd.f32 %v481, %v486
  %v498 = vadd.f32 %v482, %v488
  %v499 = vadd.f32 %v483, %v490
  %v500 = vadd.f32 %v484, %v492
  %501 = vrot.lane.b32.xlu0 %v461, 80
  %v502 = vpop.permute.xlu0 %501
  %503 = vrot.lane.b32.xlu0 %v462, 80
  %v504 = vpop.permute.xlu0 %503
  %505 = vrot.lane.b32.xlu0 %v463, 80
  %v506 = vpop.permute.xlu0 %505
  %507 = vrot.lane.b32.xlu0 %v464, 80
  %v508 = vpop.permute.xlu0 %507
  %v513 = vadd.f32 %v497, %v502
  %v514 = vadd.f32 %v498, %v504
  %v515 = vadd.f32 %v499, %v506
  %v516 = vadd.f32 %v500, %v508
  %s517 = sld [smem:[#allocation2]]
  %v518 = vstv %s517
  %523 = vrot.lane.b32.xlu0 %v412, 112
  %v524 = vpop.permute.xlu0 %523
  %525 = vrot.lane.b32.xlu0 %v417, 112
  %v526 = vpop.permute.xlu0 %525
  %527 = vrot.lane.b32.xlu0 %v422, 112
  %v528 = vpop.permute.xlu0 %527
  %529 = vrot.lane.b32.xlu0 %v427, 112
  %v530 = vpop.permute.xlu0 %529
  %v535 = vsub.f32 %v412, %v524
  %v536 = vsub.f32 %v417, %v526
  %v537 = vsub.f32 %v422, %v528
  %v538 = vsub.f32 %v427, %v530
  %v539 = vmul.f32 %v535, %v535
  %v540 = vmul.f32 %v536, %v536
  %v541 = vmul.f32 %v537, %v537
  %v542 = vmul.f32 %v538, %v538
  %vm543 = vcmask 130048
  %v544 = vsel %vm543, %v539, 0.0
  %545 = vadd.xlane.f32.xlu0 %v544
  %v546 = vpop.xlane.xlu0 %545
  %v547 = vsel %vm543, %v540, 0.0
  %548 = vadd.xlane.f32.xlu0 %v547
  %v549 = vpop.xlane.xlu0 %548
  %v550 = vsel %vm543, %v541, 0.0
  %551 = vadd.xlane.f32.xlu0 %v550
  %v552 = vpop.xlane.xlu0 %551
  %v553 = vsel %vm543, %v542, 0.0
  %554 = vadd.xlane.f32.xlu0 %v553
  %v555 = vpop.xlane.xlu0 %554
  %v556 = vrsqrt.pop %v546
  %v557 = vmul.f32 %v546, %v556
  %vm558 = vcmp.eq.f32.partialorder %v546, inf
  %v559 = vsel %vm558, %v546, %v557
  %vm560 = vcmp.eq.f32.partialorder %v546, 0.0
  %v561 = vand.u32 %v546, 2147483648
  %v562 = vsel %vm560, %v561, %v559
  %v563 = vrsqrt.pop %v549
  %v564 = vmul.f32 %v549, %v563
  %vm565 = vcmp.eq.f32.partialorder %v549, inf
  %v566 = vsel %vm565, %v549, %v564
  %vm567 = vcmp.eq.f32.partialorder %v549, 0.0
  %v568 = vand.u32 %v549, 2147483648
  %v569 = vsel %vm567, %v568, %v566
  %v570 = vrsqrt.pop %v552
  %v571 = vmul.f32 %v552, %v570
  %vm572 = vcmp.eq.f32.partialorder %v552, inf
  %v573 = vsel %vm572, %v552, %v571
  %vm574 = vcmp.eq.f32.partialorder %v552, 0.0
  %v575 = vand.u32 %v552, 2147483648
  %v576 = vsel %vm574, %v575, %v573
  %v577 = vrsqrt.pop %v555
  %v578 = vmul.f32 %v555, %v577
  %vm579 = vcmp.eq.f32.partialorder %v555, inf
  %v580 = vsel %vm579, %v555, %v578
  %vm581 = vcmp.eq.f32.partialorder %v555, 0.0
  %v582 = vand.u32 %v555, 2147483648
  %v583 = vsel %vm581, %v582, %v580
  %v584 = vadd.f32 %v562, 0.0
  %v585 = vadd.f32 %v569, 0.0
  %v586 = vadd.f32 %v576, 0.0
  %v587 = vadd.f32 %v583, 0.0
  %588 = vrot.lane.b32.xlu0 %v412, 96
  %v589 = vpop.permute.xlu0 %588
  %590 = vrot.lane.b32.xlu0 %v417, 96
  %v591 = vpop.permute.xlu0 %590
  %592 = vrot.lane.b32.xlu0 %v422, 96
  %v593 = vpop.permute.xlu0 %592
  %594 = vrot.lane.b32.xlu0 %v427, 96
  %v595 = vpop.permute.xlu0 %594
  %v600 = vsub.f32 %v412, %v589
  %v601 = vsub.f32 %v417, %v591
  %v602 = vsub.f32 %v422, %v593
  %v603 = vsub.f32 %v427, %v595
  %v604 = vmul.f32 %v600, %v600
  %v605 = vmul.f32 %v601, %v601
  %v606 = vmul.f32 %v602, %v602
  %v607 = vmul.f32 %v603, %v603
  %v608 = vsel %vm543, %v604, 0.0
  %609 = vadd.xlane.f32.xlu0 %v608
  %v610 = vpop.xlane.xlu0 %609
  %v611 = vsel %vm543, %v605, 0.0
  %612 = vadd.xlane.f32.xlu0 %v611
  %v613 = vpop.xlane.xlu0 %612
  %v614 = vsel %vm543, %v606, 0.0
  %615 = vadd.xlane.f32.xlu0 %v614
  %v616 = vpop.xlane.xlu0 %615
  %v617 = vsel %vm543, %v607, 0.0
  %618 = vadd.xlane.f32.xlu0 %v617
  %v619 = vpop.xlane.xlu0 %618
  %v620 = vrsqrt.pop %v610
  %v621 = vmul.f32 %v610, %v620
  %vm622 = vcmp.eq.f32.partialorder %v610, inf
  %v623 = vsel %vm622, %v610, %v621
  %vm624 = vcmp.eq.f32.partialorder %v610, 0.0
  %v625 = vand.u32 %v610, 2147483648
  %v626 = vsel %vm624, %v625, %v623
  %v627 = vrsqrt.pop %v613
  %v628 = vmul.f32 %v613, %v627
  %vm629 = vcmp.eq.f32.partialorder %v613, inf
  %v630 = vsel %vm629, %v613, %v628
  %vm631 = vcmp.eq.f32.partialorder %v613, 0.0
  %v632 = vand.u32 %v613, 2147483648
  %v633 = vsel %vm631, %v632, %v630
  %v634 = vrsqrt.pop %v616
  %v635 = vmul.f32 %v616, %v634
  %vm636 = vcmp.eq.f32.partialorder %v616, inf
  %v637 = vsel %vm636, %v616, %v635
  %vm638 = vcmp.eq.f32.partialorder %v616, 0.0
  %v639 = vand.u32 %v616, 2147483648
  %v640 = vsel %vm638, %v639, %v637
  %v641 = vrsqrt.pop %v619
  %v642 = vmul.f32 %v619, %v641
  %vm643 = vcmp.eq.f32.partialorder %v619, inf
  %v644 = vsel %vm643, %v619, %v642
  %vm645 = vcmp.eq.f32.partialorder %v619, 0.0
  %v646 = vand.u32 %v619, 2147483648
  %v647 = vsel %vm645, %v646, %v644
  %v648 = vadd.f32 %v584, %v626
  %v649 = vadd.f32 %v585, %v633
  %v650 = vadd.f32 %v586, %v640
  %v651 = vadd.f32 %v587, %v647
  %652 = vrot.lane.b32.xlu0 %v412, 80
  %v653 = vpop.permute.xlu0 %652
  %654 = vrot.lane.b32.xlu0 %v417, 80
  %v655 = vpop.permute.xlu0 %654
  %656 = vrot.lane.b32.xlu0 %v422, 80
  %v657 = vpop.permute.xlu0 %656
  %658 = vrot.lane.b32.xlu0 %v427, 80
  %v659 = vpop.permute.xlu0 %658
  %v664 = vsub.f32 %v412, %v653
  %v665 = vsub.f32 %v417, %v655
  %v666 = vsub.f32 %v422, %v657
  %v667 = vsub.f32 %v427, %v659
  %v668 = vmul.f32 %v664, %v664
  %v669 = vmul.f32 %v665, %v665
  %v670 = vmul.f32 %v666, %v666
  %v671 = vmul.f32 %v667, %v667
  %v672 = vsel %vm543, %v668, 0.0
  %673 = vadd.xlane.f32.xlu0 %v672
  %v674 = vpop.xlane.xlu0 %673
  %v675 = vsel %vm543, %v669, 0.0
  %676 = vadd.xlane.f32.xlu0 %v675
  %v677 = vpop.xlane.xlu0 %676
  %v678 = vsel %vm543, %v670, 0.0
  %679 = vadd.xlane.f32.xlu0 %v678
  %v680 = vpop.xlane.xlu0 %679
  %v681 = vsel %vm543, %v671, 0.0
  %682 = vadd.xlane.f32.xlu0 %v681
  %v683 = vpop.xlane.xlu0 %682
  %v684 = vrsqrt.pop %v674
  %v685 = vmul.f32 %v674, %v684
  %vm686 = vcmp.eq.f32.partialorder %v674, inf
  %v687 = vsel %vm686, %v674, %v685
  %vm688 = vcmp.eq.f32.partialorder %v674, 0.0
  %v689 = vand.u32 %v674, 2147483648
  %v690 = vsel %vm688, %v689, %v687
  %v691 = vrsqrt.pop %v677
  %v692 = vmul.f32 %v677, %v691
  %vm693 = vcmp.eq.f32.partialorder %v677, inf
  %v694 = vsel %vm693, %v677, %v692
  %vm695 = vcmp.eq.f32.partialorder %v677, 0.0
  %v696 = vand.u32 %v677, 2147483648
  %v697 = vsel %vm695, %v696, %v694
  %v698 = vrsqrt.pop %v680
  %v699 = vmul.f32 %v680, %v698
  %vm700 = vcmp.eq.f32.partialorder %v680, inf
  %v701 = vsel %vm700, %v680, %v699
  %vm702 = vcmp.eq.f32.partialorder %v680, 0.0
  %v703 = vand.u32 %v680, 2147483648
  %v704 = vsel %vm702, %v703, %v701
  %v705 = vrsqrt.pop %v683
  %v706 = vmul.f32 %v683, %v705
  %vm707 = vcmp.eq.f32.partialorder %v683, inf
  %v708 = vsel %vm707, %v683, %v706
  %vm709 = vcmp.eq.f32.partialorder %v683, 0.0
  %v710 = vand.u32 %v683, 2147483648
  %v711 = vsel %vm709, %v710, %v708
  %v712 = vadd.f32 %v648, %v690
  %v713 = vadd.f32 %v649, %v697
  %v714 = vadd.f32 %v650, %v704
  %v715 = vadd.f32 %v651, %v711
  %720 = vrot.lane.b32.xlu0 %v539, 112
  %v721 = vpop.permute.xlu0 %720
  %722 = vrot.lane.b32.xlu0 %v540, 112
  %v723 = vpop.permute.xlu0 %722
  %724 = vrot.lane.b32.xlu0 %v541, 112
  %v725 = vpop.permute.xlu0 %724
  %726 = vrot.lane.b32.xlu0 %v542, 112
  %v727 = vpop.permute.xlu0 %726
  %v732 = vsel %vm543, %v721, 0.0
  %733 = vadd.xlane.f32.xlu0 %v732
  %v734 = vpop.xlane.xlu0 %733
  %v735 = vsel %vm543, %v723, 0.0
  %736 = vadd.xlane.f32.xlu0 %v735
  %v737 = vpop.xlane.xlu0 %736
  %v738 = vsel %vm543, %v725, 0.0
  %739 = vadd.xlane.f32.xlu0 %v738
  %v740 = vpop.xlane.xlu0 %739
  %v741 = vsel %vm543, %v727, 0.0
  %742 = vadd.xlane.f32.xlu0 %v741
  %v743 = vpop.xlane.xlu0 %742
  %v744 = vrsqrt.pop %v734
  %v745 = vmul.f32 %v734, %v744
  %vm746 = vcmp.eq.f32.partialorder %v734, inf
  %v747 = vsel %vm746, %v734, %v745
  %vm748 = vcmp.eq.f32.partialorder %v734, 0.0
  %v749 = vand.u32 %v734, 2147483648
  %v750 = vsel %vm748, %v749, %v747
  %v751 = vrsqrt.pop %v737
  %v752 = vmul.f32 %v737, %v751
  %vm753 = vcmp.eq.f32.partialorder %v737, inf
  %v754 = vsel %vm753, %v737, %v752
  %vm755 = vcmp.eq.f32.partialorder %v737, 0.0
  %v756 = vand.u32 %v737, 2147483648
  %v757 = vsel %vm755, %v756, %v754
  %v758 = vrsqrt.pop %v740
  %v759 = vmul.f32 %v740, %v758
  %vm760 = vcmp.eq.f32.partialorder %v740, inf
  %v761 = vsel %vm760, %v740, %v759
  %vm762 = vcmp.eq.f32.partialorder %v740, 0.0
  %v763 = vand.u32 %v740, 2147483648
  %v764 = vsel %vm762, %v763, %v761
  %v765 = vrsqrt.pop %v743
  %v766 = vmul.f32 %v743, %v765
  %vm767 = vcmp.eq.f32.partialorder %v743, inf
  %v768 = vsel %vm767, %v743, %v766
  %vm769 = vcmp.eq.f32.partialorder %v743, 0.0
  %v770 = vand.u32 %v743, 2147483648
  %v771 = vsel %vm769, %v770, %v768
  %v772 = vadd.f32 %v712, %v750
  %v773 = vadd.f32 %v713, %v757
  %v774 = vadd.f32 %v714, %v764
  %v775 = vadd.f32 %v715, %v771
  %780 = vrot.lane.b32.xlu0 %v604, 112
  %v781 = vpop.permute.xlu0 %780
  %782 = vrot.lane.b32.xlu0 %v605, 112
  %v783 = vpop.permute.xlu0 %782
  %784 = vrot.lane.b32.xlu0 %v606, 112
  %v785 = vpop.permute.xlu0 %784
  %786 = vrot.lane.b32.xlu0 %v607, 112
  %v787 = vpop.permute.xlu0 %786
  %v792 = vsel %vm543, %v781, 0.0
  %793 = vadd.xlane.f32.xlu0 %v792
  %v794 = vpop.xlane.xlu0 %793
  %v795 = vsel %vm543, %v783, 0.0
  %796 = vadd.xlane.f32.xlu0 %v795
  %v797 = vpop.xlane.xlu0 %796
  %v798 = vsel %vm543, %v785, 0.0
  %799 = vadd.xlane.f32.xlu0 %v798
  %v800 = vpop.xlane.xlu0 %799
  %v801 = vsel %vm543, %v787, 0.0
  %802 = vadd.xlane.f32.xlu0 %v801
  %v803 = vpop.xlane.xlu0 %802
  %v804 = vrsqrt.pop %v794
  %v805 = vmul.f32 %v794, %v804
  %vm806 = vcmp.eq.f32.partialorder %v794, inf
  %v807 = vsel %vm806, %v794, %v805
  %vm808 = vcmp.eq.f32.partialorder %v794, 0.0
  %v809 = vand.u32 %v794, 2147483648
  %v810 = vsel %vm808, %v809, %v807
  %v811 = vrsqrt.pop %v797
  %v812 = vmul.f32 %v797, %v811
  %vm813 = vcmp.eq.f32.partialorder %v797, inf
  %v814 = vsel %vm813, %v797, %v812
  %vm815 = vcmp.eq.f32.partialorder %v797, 0.0
  %v816 = vand.u32 %v797, 2147483648
  %v817 = vsel %vm815, %v816, %v814
  %v818 = vrsqrt.pop %v800
  %v819 = vmul.f32 %v800, %v818
  %vm820 = vcmp.eq.f32.partialorder %v800, inf
  %v821 = vsel %vm820, %v800, %v819
  %vm822 = vcmp.eq.f32.partialorder %v800, 0.0
  %v823 = vand.u32 %v800, 2147483648
  %v824 = vsel %vm822, %v823, %v821
  %v825 = vrsqrt.pop %v803
  %v826 = vmul.f32 %v803, %v825
  %vm827 = vcmp.eq.f32.partialorder %v803, inf
  %v828 = vsel %vm827, %v803, %v826
  %vm829 = vcmp.eq.f32.partialorder %v803, 0.0
  %v830 = vand.u32 %v803, 2147483648
  %v831 = vsel %vm829, %v830, %v828
  %v832 = vadd.f32 %v772, %v810
  %v833 = vadd.f32 %v773, %v817
  %v834 = vadd.f32 %v774, %v824
  %v835 = vadd.f32 %v775, %v831
  %836 = vrot.lane.b32.xlu0 %v539, 96
  %v837 = vpop.permute.xlu0 %836
  %838 = vrot.lane.b32.xlu0 %v540, 96
  %v839 = vpop.permute.xlu0 %838
  %840 = vrot.lane.b32.xlu0 %v541, 96
  %v841 = vpop.permute.xlu0 %840
  %842 = vrot.lane.b32.xlu0 %v542, 96
  %v843 = vpop.permute.xlu0 %842
  %v848 = vsel %vm543, %v837, 0.0
  %849 = vadd.xlane.f32.xlu0 %v848
  %v850 = vpop.xlane.xlu0 %849
  %v851 = vsel %vm543, %v839, 0.0
  %852 = vadd.xlane.f32.xlu0 %v851
  %v853 = vpop.xlane.xlu0 %852
  %v854 = vsel %vm543, %v841, 0.0
  %855 = vadd.xlane.f32.xlu0 %v854
  %v856 = vpop.xlane.xlu0 %855
  %v857 = vsel %vm543, %v843, 0.0
  %858 = vadd.xlane.f32.xlu0 %v857
  %v859 = vpop.xlane.xlu0 %858
  %v860 = vrsqrt.pop %v850
  %v861 = vmul.f32 %v850, %v860
  %vm862 = vcmp.eq.f32.partialorder %v850, inf
  %v863 = vsel %vm862, %v850, %v861
  %vm864 = vcmp.eq.f32.partialorder %v850, 0.0
  %v865 = vand.u32 %v850, 2147483648
  %v866 = vsel %vm864, %v865, %v863
  %v867 = vrsqrt.pop %v853
  %v868 = vmul.f32 %v853, %v867
  %vm869 = vcmp.eq.f32.partialorder %v853, inf
  %v870 = vsel %vm869, %v853, %v868
  %vm871 = vcmp.eq.f32.partialorder %v853, 0.0
  %v872 = vand.u32 %v853, 2147483648
  %v873 = vsel %vm871, %v872, %v870
  %v874 = vrsqrt.pop %v856
  %v875 = vmul.f32 %v856, %v874
  %vm876 = vcmp.eq.f32.partialorder %v856, inf
  %v877 = vsel %vm876, %v856, %v875
  %vm878 = vcmp.eq.f32.partialorder %v856, 0.0
  %v879 = vand.u32 %v856, 2147483648
  %v880 = vsel %vm878, %v879, %v877
  %v881 = vrsqrt.pop %v859
  %v882 = vmul.f32 %v859, %v881
  %vm883 = vcmp.eq.f32.partialorder %v859, inf
  %v884 = vsel %vm883, %v859, %v882
  %vm885 = vcmp.eq.f32.partialorder %v859, 0.0
  %v886 = vand.u32 %v859, 2147483648
  %v887 = vsel %vm885, %v886, %v884
  %v888 = vadd.f32 %v832, %v866
  %v889 = vadd.f32 %v833, %v873
  %v890 = vadd.f32 %v834, %v880
  %v891 = vadd.f32 %v835, %v887
  %v892 = vadd.f32 %v888, %v889
  %v893 = vadd.f32 %v892, %v890
  %v894 = vadd.f32 %v893, %v891
  %v895 = vrot.slane %v894, 4
  %v896 = vadd.f32 %v894, %v895
  %v897 = vrot.slane %v896, 2
  %v898 = vadd.f32 %v896, %v897
  %v899 = vrot.slane %v898, 1
  %v900 = vadd.f32 %v898, %v899
  %v901 = vmul.f32 %v900, 0.0052083335
  %vm902 = vcmp.ne.f32.partialorder %v518, %v518
  %v903 = vmul.f32 %v518, 0.9
  %v904 = vmul.f32 %v901, 0.1
  %v905 = vadd.f32 %v903, %v904
  %v906 = vsel %vm902, %v901, %v905
  %vm907 = vcmp.ne.f32.partialorder %v906, %v906
  %v908 = vrcp.pop %v906
  %v909 = vmul.f32 1.0, %v908
  %v910 = vsel %vm907, 1.0, %v909
  %v911 = vmul.f32 %v513, %v910
  %v912 = vmul.f32 %v514, %v910
  %v913 = vmul.f32 %v515, %v910
  %v914 = vmul.f32 %v516, %v910
  %919 = vrot.lane.b32.xlu0 %v911, 64
  %v920 = vpop.permute.xlu0 %919
  %921 = vrot.lane.b32.xlu0 %v912, 64
  %v922 = vpop.permute.xlu0 %921
  %923 = vrot.lane.b32.xlu0 %v913, 64
  %v924 = vpop.permute.xlu0 %923
  %925 = vrot.lane.b32.xlu0 %v914, 64
  %v926 = vpop.permute.xlu0 %925
  %v931 = vadd.f32 %v412, %v920
  %v932 = vadd.f32 %v417, %v922
  %v933 = vadd.f32 %v422, %v924
  %v934 = vadd.f32 %v427, %v926
  %939 = vrot.lane.b32.xlu0 %v931, 64
  %v940 = vpop.permute.xlu0 %939
  %941 = vrot.lane.b32.xlu0 %v932, 64
  %v942 = vpop.permute.xlu0 %941
  %943 = vrot.lane.b32.xlu0 %v933, 64
  %v944 = vpop.permute.xlu0 %943
  %945 = vrot.lane.b32.xlu0 %v934, 64
  %v946 = vpop.permute.xlu0 %945
  %951 = vst.msk [vmem:[%s3] sm:$0xff] %vm543, %v940
  %952 = vst.msk [vmem:[%s3 + $0x8] sm:$0xff] %vm543, %v942
  %953 = vst.msk [vmem:[%s3 + $0x10] sm:$0xff] %vm543, %v944
  %954 = vst.msk [vmem:[%s3 + $0x18] sm:$0xff] %vm543, %v946
  %v955 = vmul.f32 %v931, %v931
  %v956 = vmul.f32 %v932, %v932
  %v957 = vmul.f32 %v933, %v933
  %v958 = vmul.f32 %v934, %v934
  %963 = vrot.lane.b32.xlu0 %v955, 64
  %v964 = vpop.permute.xlu0 %963
  %965 = vrot.lane.b32.xlu0 %v956, 64
  %v966 = vpop.permute.xlu0 %965
  %967 = vrot.lane.b32.xlu0 %v957, 64
  %v968 = vpop.permute.xlu0 %967
  %969 = vrot.lane.b32.xlu0 %v958, 64
  %v970 = vpop.permute.xlu0 %969
  %v975 = vsel %vm543, %v964, 0.0
  %976 = vadd.xlane.f32.xlu0 %v975
  %v977 = vpop.xlane.xlu0 %976
  %v978 = vsel %vm543, %v966, 0.0
  %979 = vadd.xlane.f32.xlu0 %v978
  %v980 = vpop.xlane.xlu0 %979
  %v981 = vsel %vm543, %v968, 0.0
  %982 = vadd.xlane.f32.xlu0 %v981
  %v983 = vpop.xlane.xlu0 %982
  %v984 = vsel %vm543, %v970, 0.0
  %985 = vadd.xlane.f32.xlu0 %v984
  %v986 = vpop.xlane.xlu0 %985
  %v987 = vrsqrt.pop %v977
  %v988 = vmul.f32 %v977, %v987
  %vm989 = vcmp.eq.f32.partialorder %v977, inf
  %v990 = vsel %vm989, %v977, %v988
  %vm991 = vcmp.eq.f32.partialorder %v977, 0.0
  %v992 = vand.u32 %v977, 2147483648
  %v993 = vsel %vm991, %v992, %v990
  %v994 = vrsqrt.pop %v980
  %v995 = vmul.f32 %v980, %v994
  %vm996 = vcmp.eq.f32.partialorder %v980, inf
  %v997 = vsel %vm996, %v980, %v995
  %vm998 = vcmp.eq.f32.partialorder %v980, 0.0
  %v999 = vand.u32 %v980, 2147483648
  %v1000 = vsel %vm998, %v999, %v997
  %v1001 = vrsqrt.pop %v983
  %v1002 = vmul.f32 %v983, %v1001
  %vm1003 = vcmp.eq.f32.partialorder %v983, inf
  %v1004 = vsel %vm1003, %v983, %v1002
  %vm1005 = vcmp.eq.f32.partialorder %v983, 0.0
  %v1006 = vand.u32 %v983, 2147483648
  %v1007 = vsel %vm1005, %v1006, %v1004
  %v1008 = vrsqrt.pop %v986
  %v1009 = vmul.f32 %v986, %v1008
  %vm1010 = vcmp.eq.f32.partialorder %v986, inf
  %v1011 = vsel %vm1010, %v986, %v1009
  %vm1012 = vcmp.eq.f32.partialorder %v986, 0.0
  %v1013 = vand.u32 %v986, 2147483648
  %v1014 = vsel %vm1012, %v1013, %v1011
  %vm1015 = vcmask 138368
  %1016 = vst.msk [vmem:[%s3] sm:$0xff] %vm1015, %v993
  %1017 = vst.msk [vmem:[%s3 + $0x8] sm:$0xff] %vm1015, %v1000
  %1018 = vst.msk [vmem:[%s3 + $0x10] sm:$0xff] %vm1015, %v1007
  %1019 = vst.msk [vmem:[%s3 + $0x18] sm:$0xff] %vm1015, %v1014
  %vm1020 = vcmask 146568
  %1021 = vst.msk [vmem:[%s3] sm:$0xff] %vm1020, %v906
  %1022 = vst.msk [vmem:[%s3 + $0x8] sm:$0xff] %vm1020, %v906
  %1023 = vst.msk [vmem:[%s3 + $0x10] sm:$0xff] %vm1020, %v906
  %1024 = vst.msk [vmem:[%s3 + $0x18] sm:$0xff] %vm1020, %v906
  // Predicated region
  $region14: #{het_control_forward.1} parent=0 // pred_check
    _
  $region15: #{het_control_forward.1} parent=0 // pred_check_branch
    %1026 = sbr.rel (0) target = $region17
  $region16: #{het_control_forward.1} parent=0 // pred_region
    _
  $region17: #{het_control_forward.1} parent=0 // pred_fallthru
    _
  // Predicated region
  $region18: #{het_control_forward.1} parent=0 // pred_check
    _
  $region19: #{het_control_forward.1} parent=0 // pred_check_branch
    %1028 = sbr.rel (0) target = $region21
  $region20: #{het_control_forward.1} parent=0 // pred_region
    _
  $region21: #{het_control_forward.1} parent=0 // pred_fallthru
    _

</llo_original>
